<compile_context>
chip_gen: v7x
topology: tpu7x:2x2x1
jax: 0.10.0
libtpu: 0.0.40
codegen_flags: <defaults>
</compile_context>

<pallas_src>
import functools
import math

import jax
import jax.numpy as jnp
from jax.experimental import pallas as pl
from jax.experimental.pallas import tpu as pltpu


_LN_EPS = 1e-6  # the module constructs every LayerNorm with eps=1e-06 explicitly


# ----------------------------- in-kernel helpers -----------------------------

def _gelu_exact(x):
    # nn.GELU() default = exact erf formulation.
    return 0.5 * x * (1.0 + jax.lax.erf(x * (1.0 / math.sqrt(2.0))))


def _layernorm_rows(y, gamma, beta):
    # LayerNorm over the last (lane) axis; y f32 (R, E), gamma/beta (1, E) f32.
    mu = jnp.mean(y, axis=-1, keepdims=True)
    var = jnp.mean((y - mu) ** 2, axis=-1, keepdims=True)
    return (y - mu) * jax.lax.rsqrt(var + _LN_EPS) * gamma + beta


# ------------------ kernel A: q_downsample + fused q in-proj ------------------

def _q_kernel(x0_ref, w1_ref, b1_ref, w2_ref, b2_ref, g_ref, be_ref,
              wq_ref, bq_ref, o_ref, *, scale):
    x0 = x0_ref[0]                                                    # (N, E) bf16
    # Linear over the token axis, PyTorch weight layout (C, N): (C,N)@(N,E) -> (C,E).
    # Keeps E in the lane dimension -> no transposes, lane-dense stores.
    h = jnp.dot(w1_ref[...], x0, preferred_element_type=jnp.float32) + b1_ref[...]
    h = _gelu_exact(h)
    z = jnp.dot(w2_ref[...], h.astype(jnp.bfloat16),
                preferred_element_type=jnp.float32) + b2_ref[...]     # (C, E) f32
    # LayerNorm over the C (sublane) axis == last dim of the PyTorch (B, E, C) tensor.
    mu = jnp.mean(z, axis=0, keepdims=True)
    var = jnp.mean((z - mu) ** 2, axis=0, keepdims=True)
    zn = (z - mu) * jax.lax.rsqrt(var + _LN_EPS) * g_ref[...] + be_ref[...]
    # MHA q in-projection + 1/sqrt(head_dim) scaling fused in.
    qp = jnp.dot(zn.astype(jnp.bfloat16), wq_ref[...],
                 preferred_element_type=jnp.float32) + bq_ref[...]
    o_ref[0] = (qp * scale).astype(o_ref.dtype)                       # (C, E)


def q_downsample_qproj(x0, qd, mha, *, num_heads):
    """x0: (B, N, E) -> scaled, in-projected query (B, C, E) in bf16."""
    B, N, E = x0.shape
    C = qd["w1"].shape[0]
    head_dim = E // num_heads
    scale = 1.0 / math.sqrt(head_dim)
    bf = jnp.bfloat16
    kern = functools.partial(_q_kernel, scale=scale)
    return pl.pallas_call(
        kern,
        out_shape=jax.ShapeDtypeStruct((B, C, E), jnp.bfloat16),
        grid=(B,),
        in_specs=[
            pl.BlockSpec((1, N, E), lambda b: (b, 0, 0)),
            pl.BlockSpec((C, N), lambda b: (0, 0)),
            pl.BlockSpec((C, 1), lambda b: (0, 0)),
            pl.BlockSpec((C, C), lambda b: (0, 0)),
            pl.BlockSpec((C, 1), lambda b: (0, 0)),
            pl.BlockSpec((C, 1), lambda b: (0, 0)),
            pl.BlockSpec((C, 1), lambda b: (0, 0)),
            pl.BlockSpec((E, E), lambda b: (0, 0)),
            pl.BlockSpec((1, E), lambda b: (0, 0)),
        ],
        out_specs=pl.BlockSpec((1, C, E), lambda b: (b, 0, 0)),
        compiler_params=pltpu.CompilerParams(dimension_semantics=("parallel",)),
    )(x0.astype(bf),
      qd["w1"].astype(bf), qd["b1"], qd["w2"].astype(bf), qd["b2"], qd["g"], qd["beta"],
      mha["wq"].astype(bf), mha["bq"])


# --------- kernel B: fused k_proj + v_proj + MultiheadAttention (flash) --------

def _kv_attn_kernel(q_ref, x_ref,
                    w1kv_ref, b1kv_ref,
                    wk2_ref, bk2_ref, gk_ref, bek_ref,
                    wv2_ref, bv2_ref, gv_ref, bev_ref,
                    wki_ref, bki_ref, wvi_ref, bvi_ref, wo_ref, bo_ref,
                    o_ref, m_ref, l_ref, acc_ref,
                    *, num_heads, head_dim, embed_dim):
    s_idx = pl.program_id(1)

    @pl.when(s_idx == 0)
    def _():
        m_ref[...] = jnp.full_like(m_ref, -jnp.inf)
        l_ref[...] = jnp.zeros_like(l_ref)
        acc_ref[...] = jnp.zeros_like(acc_ref)

    x = x_ref[0]                                                      # (ts, D) bf16

    # ---- packed first Linear of k_proj & v_proj: one (ts,D)x(D,2E) MXU pass ----
    h_kv = jnp.dot(x, w1kv_ref[...], preferred_element_type=jnp.float32) + b1kv_ref[...]
    h_kv = _gelu_exact(h_kv)                                          # (ts, 2E) f32
    hk = h_kv[:, :embed_dim].astype(jnp.bfloat16)
    hv = h_kv[:, embed_dim:].astype(jnp.bfloat16)

    # ---- k_proj: second Linear -> LayerNorm ----
    k_pre = jnp.dot(hk, wk2_ref[...], preferred_element_type=jnp.float32) + bk2_ref[...]
    k_ln = _layernorm_rows(k_pre, gk_ref[...], bek_ref[...])          # (ts, E) f32

    # ---- v_proj: second Linear -> LayerNorm ----
    v_pre = jnp.dot(hv, wv2_ref[...], preferred_element_type=jnp.float32) + bv2_ref[...]
    v_ln = _layernorm_rows(v_pre, gv_ref[...], bev_ref[...])          # (ts, E) f32

    # ---- MHA k/v in-projection ----
    k_in = (jnp.dot(k_ln.astype(jnp.bfloat16), wki_ref[...],
                    preferred_element_type=jnp.float32) + bki_ref[...]).astype(jnp.bfloat16)
    v_in = (jnp.dot(v_ln.astype(jnp.bfloat16), wvi_ref[...],
                    preferred_element_type=jnp.float32) + bvi_ref[...]).astype(jnp.bfloat16)

    q = q_ref[0]                                                      # (C, E) bf16, pre-scaled

    # ---- per-head online-softmax attention, accumulated in place (no concat) ----
    for h in range(num_heads):
        lo = h * head_dim
        qh = q[:, lo:lo + head_dim]                                   # (C, hd)
        kh = k_in[:, lo:lo + head_dim]                                # (ts, hd)
        vh = v_in[:, lo:lo + head_dim]                                # (ts, hd)
        sc = jax.lax.dot_general(qh, kh, (((1,), (1,)), ((), ())),
                                 preferred_element_type=jnp.float32)  # (C, ts)
        m_prev = m_ref[:, h:h + 1]
        m_new = jnp.maximum(m_prev, jnp.max(sc, axis=-1, keepdims=True))
        alpha = jnp.exp(m_prev - m_new)
        p = jnp.exp(sc - m_new)                                       # (C, ts) f32
        l_ref[:, h:h + 1] = alpha * l_ref[:, h:h + 1] + jnp.sum(p, axis=-1, keepdims=True)
        m_ref[:, h:h + 1] = m_new
        pv = jnp.dot(p.astype(jnp.bfloat16), vh,
                     preferred_element_type=jnp.float32)              # (C, hd)
        acc_ref[:, lo:lo + head_dim] = alpha * acc_ref[:, lo:lo + head_dim] + pv

    # ---- finalize on the last S tile: normalize per head, out-projection ----
    @pl.when(s_idx == pl.num_programs(1) - 1)
    def _():
        for h in range(num_heads):
            lo = h * head_dim
            inv = pl.reciprocal(l_ref[:, h:h + 1], approx=True)
            acc_ref[:, lo:lo + head_dim] = acc_ref[:, lo:lo + head_dim] * inv
        ctx = acc_ref[...].astype(jnp.bfloat16)                       # (C, E)
        o_ref[0] = (jnp.dot(ctx, wo_ref[...], preferred_element_type=jnp.float32)
                    + bo_ref[...]).astype(o_ref.dtype)


def fused_kv_attention(q, x_multi, kp, vp, mha, *, num_heads, s_tile=None):
    """q: (B, C, E) bf16 (pre-scaled, in-projected); x_multi: (B, S, D) -> (B, C, E) f32."""
    B, C, E = q.shape
    _, S, D = x_multi.shape
    head_dim = E // num_heads
    if s_tile is None:
        s_tile = S if S <= 256 else 256
    assert S % s_tile == 0, (S, s_tile)
    n_s = S // s_tile
    bf = jnp.bfloat16
    kern = functools.partial(_kv_attn_kernel, num_heads=num_heads,
                             head_dim=head_dim, embed_dim=E)

    # Pack the two hidden_size->embed_dim first Linears into one wide matmul.
    w1_kv = jnp.concatenate([kp["w1"], vp["w1"]], axis=1).astype(bf)  # (D, 2E)
    b1_kv = jnp.concatenate([kp["b1"], vp["b1"]], axis=1)             # (1, 2E)

    def const2d(shape):
        return pl.BlockSpec(shape, lambda b, s: (0, 0))

    return pl.pallas_call(
        kern,
        out_shape=jax.ShapeDtypeStruct((B, C, E), jnp.float32),
        grid=(B, n_s),
        in_specs=[
            pl.BlockSpec((1, C, E), lambda b, s: (b, 0, 0)),          # q (resident per b)
            pl.BlockSpec((1, s_tile, D), lambda b, s: (b, s, 0)),     # x_multi tile
            const2d((D, 2 * E)), const2d((1, 2 * E)),                 # packed first linears
            const2d((E, E)), const2d((1, E)),
            const2d((1, E)), const2d((1, E)),                         # k_proj linear2 + LN
            const2d((E, E)), const2d((1, E)),
            const2d((1, E)), const2d((1, E)),                         # v_proj linear2 + LN
            const2d((E, E)), const2d((1, E)),                         # MHA k in-proj
            const2d((E, E)), const2d((1, E)),                         # MHA v in-proj
            const2d((E, E)), const2d((1, E)),                         # MHA out-proj
        ],
        out_specs=pl.BlockSpec((1, C, E), lambda b, s: (b, 0, 0)),
        scratch_shapes=[
            pltpu.VMEM((C, num_heads), jnp.float32),                  # m (online-softmax max)
            pltpu.VMEM((C, num_heads), jnp.float32),                  # l (denominator)
            pltpu.VMEM((C, E), jnp.float32),                          # context accumulator
        ],
        compiler_params=pltpu.CompilerParams(
            dimension_semantics=("parallel", "arbitrary")),
    )(q,
      x_multi.astype(bf),
      w1_kv, b1_kv,
      kp["w2"].astype(bf), kp["b2"], kp["g"], kp["beta"],
      vp["w2"].astype(bf), vp["b2"], vp["g"], vp["beta"],
      mha["wk"].astype(bf), mha["bk"], mha["wv"].astype(bf), mha["bv"],
      mha["wo"].astype(bf), mha["bo"])


# ------------------------------ module forward --------------------------------

def token_attention_deep_forward(x, params, *, num_heads=8, s_tile=None):
    """x = (x0, x_multi); x0: (B, N, E), x_multi: (B, S, D) -> (B, C, E)."""
    # TODO(synk): attn_mask is not supported (the module's default attn_mask=None path only).
    x0, x_multi = x[0], x[1]
    q = q_downsample_qproj(x0, params["q_down"], params["mha"], num_heads=num_heads)
    return fused_kv_attention(q, x_multi, params["k_proj"], params["v_proj"],
                              params["mha"], num_heads=num_heads, s_tile=s_tile)


# ------------------------------ parameter init --------------------------------

def init_params(key, *, N, C, E, D):
    ks = jax.random.split(key, 20)
    w = lambda k, shape: jax.random.normal(k, shape, jnp.float32) * 0.05
    ones = lambda shape: jnp.ones(shape, jnp.float32)
    zeros = lambda shape: jnp.zeros(shape, jnp.float32)

    # q_downsample weights kept in PyTorch (out, in) layout; biases/LN params as (C, 1).
    q_down = dict(w1=w(ks[0], (C, N)), b1=w(ks[1], (C, 1)),
                  w2=w(ks[2], (C, C)), b2=w(ks[3], (C, 1)),
                  g=ones((C, 1)), beta=zeros((C, 1)))
    # k_proj / v_proj / MHA weights pre-transposed to (in, out); vectors as (1, E).
    k_proj = dict(w1=w(ks[4], (D, E)), b1=w(ks[5], (1, E)),
                  w2=w(ks[6], (E, E)), b2=w(ks[7], (1, E)),
                  g=ones((1, E)), beta=zeros((1, E)))
    v_proj = dict(w1=w(ks[8], (D, E)), b1=w(ks[9], (1, E)),
                  w2=w(ks[10], (E, E)), b2=w(ks[11], (1, E)),
                  g=ones((1, E)), beta=zeros((1, E)))
    mha = dict(wq=w(ks[12], (E, E)), bq=w(ks[13], (1, E)),
               wk=w(ks[14], (E, E)), bk=w(ks[15], (1, E)),
               wv=w(ks[16], (E, E)), bv=w(ks[17], (1, E)),
               wo=w(ks[18], (E, E)), bo=w(ks[19], (1, E)))
    return dict(q_down=q_down, k_proj=k_proj, v_proj=v_proj, mha=mha)


# ----------------------------------- main --------------------------------------

if __name__ == "__main__":
    # Small shapes consistent with the module (scaled down from visual_token_count=576,
    # hidden_size=4096, embed_dim=tower hidden, combined_token_count configurable):
    B = 2          # batch
    N = 16         # visual_token_count
    C = 4          # combined_token_count
    E = 32         # embed_dim (divisible by num_heads=8 -> head_dim=4)
    D = 64         # hidden_size of x_multi features
    S = 16         # sequence length of x_multi
    NUM_HEADS = 8

    key = jax.random.PRNGKey(0)
    k_params, k_x0, k_xm = jax.random.split(key, 3)

    params = init_params(k_params, N=N, C=C, E=E, D=D)
    x0 = jax.random.normal(k_x0, (B, N, E), jnp.float32)
    x_multi = jax.random.normal(k_xm, (B, S, D), jnp.float32)

    # s_tile=8 -> 2 sequence tiles, exercising the online-softmax accumulation path.
    out = token_attention_deep_forward((x0, x_multi), params,
                                       num_heads=NUM_HEADS, s_tile=8)
    out = jax.block_until_ready(out)
    assert out.shape == (B, C, E), out.shape
    assert bool(jnp.all(jnp.isfinite(out)))
    print("KERNEL_OK")
</pallas_src>

<mosaic_0001>
module attributes {stable_mosaic.version = 11 : i64} {
  func.func @_q_kernel(%arg0: i32, %arg1: memref<1x16x32xbf16, #tpu.memory_space<vmem>>, %arg2: memref<4x16xbf16, #tpu.memory_space<vmem>>, %arg3: memref<4x1xf32, #tpu.memory_space<vmem>>, %arg4: memref<4x4xbf16, #tpu.memory_space<vmem>>, %arg5: memref<4x1xf32, #tpu.memory_space<vmem>>, %arg6: memref<4x1xf32, #tpu.memory_space<vmem>>, %arg7: memref<4x1xf32, #tpu.memory_space<vmem>>, %arg8: memref<32x32xbf16, #tpu.memory_space<vmem>>, %arg9: memref<1x32xf32, #tpu.memory_space<vmem>>, %arg10: memref<1x4x32xbf16, #tpu.memory_space<vmem>>) attributes {dimension_semantics = [#tpu.dimension_semantics<parallel>], iteration_bounds = array<i64: 2>, scalar_prefetch = 0 : i64, scratch_operands = 0 : i64, tpu.core_type = #tpu.core_type<tc>, window_params = [{transform_indices = @transform_0, window_bounds = array<i64: 1, 16, 32>}, {pipeline_mode = #tpu.pipeline_mode<synchronous>, transform_indices = @transform_1, window_bounds = array<i64: 4, 16>}, {pipeline_mode = #tpu.pipeline_mode<synchronous>, transform_indices = @transform_2, window_bounds = array<i64: 4, 1>}, {pipeline_mode = #tpu.pipeline_mode<synchronous>, transform_indices = @transform_3, window_bounds = array<i64: 4, 4>}, {pipeline_mode = #tpu.pipeline_mode<synchronous>, transform_indices = @transform_4, window_bounds = array<i64: 4, 1>}, {pipeline_mode = #tpu.pipeline_mode<synchronous>, transform_indices = @transform_5, window_bounds = array<i64: 4, 1>}, {pipeline_mode = #tpu.pipeline_mode<synchronous>, transform_indices = @transform_6, window_bounds = array<i64: 4, 1>}, {pipeline_mode = #tpu.pipeline_mode<synchronous>, transform_indices = @transform_7, window_bounds = array<i64: 32, 32>}, {pipeline_mode = #tpu.pipeline_mode<synchronous>, transform_indices = @transform_8, window_bounds = array<i64: 1, 32>}, {transform_indices = @transform_9, window_bounds = array<i64: 1, 4, 32>}]} {
    %c0 = arith.constant 0 : index
    %c0_0 = arith.constant 0 : index
    %c0_1 = arith.constant 0 : index
    %0 = vector.load %arg1[%c0, %c0_0, %c0_1] : memref<1x16x32xbf16, #tpu.memory_space<vmem>>, vector<1x16x32xbf16>
    %1 = vector.shape_cast %0 : vector<1x16x32xbf16> to vector<16x32xbf16>
    %c0_2 = arith.constant 0 : index
    %c0_3 = arith.constant 0 : index
    %2 = vector.load %arg2[%c0_2, %c0_3] : memref<4x16xbf16, #tpu.memory_space<vmem>>, vector<4x16xbf16>
    %cst = arith.constant dense<0.000000e+00> : vector<4x32xf32>
    %3 = tpu.matmul %2, %1, %cst {dimension_numbers = #tpu.dot_dimension_numbers<[1], [0], [0], [1], [0, 0, 1, 1], [], []>} : vector<4x16xbf16>, vector<16x32xbf16>, vector<4x32xf32> -> vector<4x32xf32>
    %c0_4 = arith.constant 0 : index
    %c0_5 = arith.constant 0 : index
    %4 = vector.load %arg3[%c0_4, %c0_5] : memref<4x1xf32, #tpu.memory_space<vmem>>, vector<4x1xf32>
    %5 = vector.broadcast %4 : vector<4x1xf32> to vector<4x32xf32>
    %6 = arith.addf %3, %5 : vector<4x32xf32>
    %cst_6 = arith.constant 5.000000e-01 : f32
    %7 = vector.broadcast %cst_6 : f32 to vector<4x32xf32>
    %8 = arith.mulf %7, %6 : vector<4x32xf32>
    %cst_7 = arith.constant 0.707106769 : f32
    %9 = vector.broadcast %cst_7 : f32 to vector<4x32xf32>
    %10 = arith.mulf %6, %9 : vector<4x32xf32>
    %11 = math.erf %10 : vector<4x32xf32>
    %cst_8 = arith.constant 1.000000e+00 : f32
    %12 = vector.broadcast %cst_8 : f32 to vector<4x32xf32>
    %13 = arith.addf %12, %11 : vector<4x32xf32>
    %14 = arith.mulf %8, %13 : vector<4x32xf32>
    %c0_9 = arith.constant 0 : index
    %c0_10 = arith.constant 0 : index
    %15 = vector.load %arg4[%c0_9, %c0_10] : memref<4x4xbf16, #tpu.memory_space<vmem>>, vector<4x4xbf16>
    %16 = arith.truncf %14 : vector<4x32xf32> to vector<4x32xbf16>
    %cst_11 = arith.constant dense<0.000000e+00> : vector<4x32xf32>
    %17 = tpu.matmul %15, %16, %cst_11 {dimension_numbers = #tpu.dot_dimension_numbers<[1], [0], [0], [1], [0, 0, 1, 1], [], []>} : vector<4x4xbf16>, vector<4x32xbf16>, vector<4x32xf32> -> vector<4x32xf32>
    %c0_12 = arith.constant 0 : index
    %c0_13 = arith.constant 0 : index
    %18 = vector.load %arg5[%c0_12, %c0_13] : memref<4x1xf32, #tpu.memory_space<vmem>>, vector<4x1xf32>
    %19 = vector.broadcast %18 : vector<4x1xf32> to vector<4x32xf32>
    %20 = arith.addf %17, %19 : vector<4x32xf32>
    %cst_14 = arith.constant dense<0.000000e+00> : vector<32xf32>
    %21 = vector.multi_reduction <add>, %20, %cst_14 [0] : vector<4x32xf32> to vector<32xf32>
    %22 = vector.shape_cast %21 : vector<32xf32> to vector<1x32xf32>
    %cst_15 = arith.constant 4.000000e+00 : f32
    %23 = vector.broadcast %cst_15 : f32 to vector<1x32xf32>
    %24 = arith.divf %22, %23 : vector<1x32xf32>
    %25 = vector.broadcast %24 : vector<1x32xf32> to vector<4x32xf32>
    %26 = arith.subf %20, %25 : vector<4x32xf32>
    %27 = arith.mulf %26, %26 : vector<4x32xf32>
    %cst_16 = arith.constant dense<0.000000e+00> : vector<32xf32>
    %28 = vector.multi_reduction <add>, %27, %cst_16 [0] : vector<4x32xf32> to vector<32xf32>
    %29 = vector.shape_cast %28 : vector<32xf32> to vector<1x32xf32>
    %cst_17 = arith.constant 4.000000e+00 : f32
    %30 = vector.broadcast %cst_17 : f32 to vector<1x32xf32>
    %31 = arith.divf %29, %30 : vector<1x32xf32>
    %32 = vector.broadcast %24 : vector<1x32xf32> to vector<4x32xf32>
    %33 = arith.subf %20, %32 : vector<4x32xf32>
    %cst_18 = arith.constant 9.99999997E-7 : f32
    %34 = vector.broadcast %cst_18 : f32 to vector<1x32xf32>
    %35 = arith.addf %31, %34 : vector<1x32xf32>
    %36 = math.rsqrt %35 : vector<1x32xf32>
    %37 = vector.broadcast %36 : vector<1x32xf32> to vector<4x32xf32>
    %38 = arith.mulf %33, %37 : vector<4x32xf32>
    %c0_19 = arith.constant 0 : index
    %c0_20 = arith.constant 0 : index
    %39 = vector.load %arg6[%c0_19, %c0_20] : memref<4x1xf32, #tpu.memory_space<vmem>>, vector<4x1xf32>
    %40 = vector.broadcast %39 : vector<4x1xf32> to vector<4x32xf32>
    %41 = arith.mulf %38, %40 : vector<4x32xf32>
    %c0_21 = arith.constant 0 : index
    %c0_22 = arith.constant 0 : index
    %42 = vector.load %arg7[%c0_21, %c0_22] : memref<4x1xf32, #tpu.memory_space<vmem>>, vector<4x1xf32>
    %43 = vector.broadcast %42 : vector<4x1xf32> to vector<4x32xf32>
    %44 = arith.addf %41, %43 : vector<4x32xf32>
    %45 = arith.truncf %44 : vector<4x32xf32> to vector<4x32xbf16>
    %c0_23 = arith.constant 0 : index
    %c0_24 = arith.constant 0 : index
    %46 = vector.load %arg8[%c0_23, %c0_24] : memref<32x32xbf16, #tpu.memory_space<vmem>>, vector<32x32xbf16>
    %cst_25 = arith.constant dense<0.000000e+00> : vector<4x32xf32>
    %47 = tpu.matmul %45, %46, %cst_25 {dimension_numbers = #tpu.dot_dimension_numbers<[1], [0], [0], [1], [0, 0, 1, 1], [], []>} : vector<4x32xbf16>, vector<32x32xbf16>, vector<4x32xf32> -> vector<4x32xf32>
    %c0_26 = arith.constant 0 : index
    %c0_27 = arith.constant 0 : index
    %48 = vector.load %arg9[%c0_26, %c0_27] : memref<1x32xf32, #tpu.memory_space<vmem>>, vector<1x32xf32>
    %49 = vector.broadcast %48 : vector<1x32xf32> to vector<4x32xf32>
    %50 = arith.addf %47, %49 : vector<4x32xf32>
    %cst_28 = arith.constant 5.000000e-01 : f32
    %51 = vector.broadcast %cst_28 : f32 to vector<4x32xf32>
    %52 = arith.mulf %50, %51 : vector<4x32xf32>
    %53 = arith.truncf %52 : vector<4x32xf32> to vector<4x32xbf16>
    %c0_29 = arith.constant 0 : index
    %c0_30 = arith.constant 0 : index
    %c0_31 = arith.constant 0 : index
    %54 = vector.load %arg10[%c0_29, %c0_30, %c0_31] : memref<1x4x32xbf16, #tpu.memory_space<vmem>>, vector<1x4x32xbf16>
    %55 = vector.shape_cast %54 : vector<1x4x32xbf16> to vector<4x32xbf16>
    %56 = vector.shape_cast %53 : vector<4x32xbf16> to vector<1x4x32xbf16>
    tpu.vector_store %arg10[%c0_29, %c0_30, %c0_31], %56 {strides = array<i32>} : memref<1x4x32xbf16, #tpu.memory_space<vmem>>, vector<1x4x32xbf16>,
    return
  }
  func.func @transform_0(%arg0: i32) -> (i32, i32, i32) {
    %c0_i32 = arith.constant 0 : i32
    %c0_i32_0 = arith.constant 0 : i32
    %c0_i32_1 = arith.constant 0 : i32
    return %arg0, %c0_i32, %c0_i32_0 : i32, i32, i32
  }
  func.func @transform_1(%arg0: i32) -> (i32, i32) {
    %c0_i32 = arith.constant 0 : i32
    %c0_i32_0 = arith.constant 0 : i32
    %c0_i32_1 = arith.constant 0 : i32
    return %c0_i32, %c0_i32_0 : i32, i32
  }
  func.func @transform_2(%arg0: i32) -> (i32, i32) {
    %c0_i32 = arith.constant 0 : i32
    %c0_i32_0 = arith.constant 0 : i32
    %c0_i32_1 = arith.constant 0 : i32
    return %c0_i32, %c0_i32_0 : i32, i32
  }
  func.func @transform_3(%arg0: i32) -> (i32, i32) {
    %c0_i32 = arith.constant 0 : i32
    %c0_i32_0 = arith.constant 0 : i32
    %c0_i32_1 = arith.constant 0 : i32
    return %c0_i32, %c0_i32_0 : i32, i32
  }
  func.func @transform_4(%arg0: i32) -> (i32, i32) {
    %c0_i32 = arith.constant 0 : i32
    %c0_i32_0 = arith.constant 0 : i32
    %c0_i32_1 = arith.constant 0 : i32
    return %c0_i32, %c0_i32_0 : i32, i32
  }
  func.func @transform_5(%arg0: i32) -> (i32, i32) {
    %c0_i32 = arith.constant 0 : i32
    %c0_i32_0 = arith.constant 0 : i32
    %c0_i32_1 = arith.constant 0 : i32
    return %c0_i32, %c0_i32_0 : i32, i32
  }
  func.func @transform_6(%arg0: i32) -> (i32, i32) {
    %c0_i32 = arith.constant 0 : i32
    %c0_i32_0 = arith.constant 0 : i32
    %c0_i32_1 = arith.constant 0 : i32
    return %c0_i32, %c0_i32_0 : i32, i32
  }
  func.func @transform_7(%arg0: i32) -> (i32, i32) {
    %c0_i32 = arith.constant 0 : i32
    %c0_i32_0 = arith.constant 0 : i32
    %c0_i32_1 = arith.constant 0 : i32
    return %c0_i32, %c0_i32_0 : i32, i32
  }
  func.func @transform_8(%arg0: i32) -> (i32, i32) {
    %c0_i32 = arith.constant 0 : i32
    %c0_i32_0 = arith.constant 0 : i32
    %c0_i32_1 = arith.constant 0 : i32
    return %c0_i32, %c0_i32_0 : i32, i32
  }
  func.func @transform_9(%arg0: i32) -> (i32, i32, i32) {
    %c0_i32 = arith.constant 0 : i32
    %c0_i32_0 = arith.constant 0 : i32
    %c0_i32_1 = arith.constant 0 : i32
    return %arg0, %c0_i32, %c0_i32_0 : i32, i32, i32
  }
}

</mosaic_0001>

<llo_original>
// kernel: tpu_custom_call.1
$region0: #{tpu_custom_call.1}
  #allocation0 [shape = 'u32[]', space=smem, size = 0x4, offset = 0x4, fixed_abs, tag = 'smem constant byte address 0x4 - core index']
  #allocation1 [shape = 'u32[144,128]{1,0:T(1,128)}', space=vmem, size = 0x12000, scoped, tag = 'internal scratch']
  %s0 = inlined_call_operand.vmem [shape: bf16[2,16,32], index: 0, kind: input, shape index: {}]
  %s1 = inlined_call_operand.vmem [shape: bf16[4,16], index: 1, kind: input, shape index: {}]
  %s2 = inlined_call_operand.vmem [shape: f32[4,1], index: 2, kind: input, shape index: {}]
  %s3 = inlined_call_operand.hbm [shape: bf16[4,4], index: 3, kind: input, shape index: {}]
  %s4 = inlined_call_operand.vmem [shape: f32[4,1], index: 4, kind: input, shape index: {}]
  %s5 = inlined_call_operand.vmem [shape: f32[4,1], index: 5, kind: input, shape index: {}]
  %s6 = inlined_call_operand.vmem [shape: f32[4,1], index: 6, kind: input, shape index: {}]
  %s7 = inlined_call_operand.vmem [shape: bf16[32,32], index: 7, kind: input, shape index: {}]
  %s8 = inlined_call_operand.vmem [shape: f32[1,32], index: 8, kind: input, shape index: {}]
  %s9 = inlined_call_operand.hbm [shape: bf16[2,4,32], index: 9, kind: output, shape index: {}]
  %s10 = sld [smem:[#allocation0]]
  $region73: #{tpu_custom_call.1} parent=0
    _
  %s12 = ssub.s32 1, %s10
  %s13 = scalar_select 0, %s12, %s10
  $region1: #{tpu_custom_call.1} parent=0
    #allocation2 [shape = 'u8[1024]{0}', space=vmem, size = 0x400, scoped, tag = 'input window, operand 3, single buffered']
    #allocation3 [shape = 's32[2]{0}', space=sflag, size = 0x8, scoped, tag = 'scoped memory for tpu_custom_call.1']
    #allocation4 [shape = 's32[2]{0}', space=sflag, size = 0x8, scoped, tag = 'scoped memory for tpu_custom_call.1']
    #allocation5 [shape = 'u8[2048]{0}', space=vmem, size = 0x800, scoped, tag = 'output window, operand 0']
    %14 = vsyncpa [#allocation3], 0
    %15 = vsyncpa [#allocation4], 0
    %s16 = scalar_lea.sflag [#allocation4], 1
    %17 = vsyncpa %s16, 0
    loop: start=0, step=1, limit=4
    $region2: #{tpu_custom_call.1} parent=1 // loop_pre_header
      _
    $region3: #{tpu_custom_call.1} parent=1 // loop_header
      %s19 = sphi 0, %s23
      %p20 = scmp.ge.s32.totalorder %s19, 4
      %s29 = sphi 0, %s31
      %s32 = sphi 0, %s29
      %s33 = sphi 0, %s32
      %s49 = sphi 0, %s33
      %s53 = sphi 0, %s53
      %s55 = sphi 0, %s53
      %s56 = sphi 0, %s55
      %s70 = sphi 0, %s56
      %s74 = sphi 0, %s74
      %s76 = sphi 0, %s74
      %s77 = sphi 0, %s76
      %s91 = sphi 0, %s77
      %s95 = sphi 0, %s95
      %s97 = sphi 0, %s95
      %s98 = sphi 0, %s97
      %s112 = sphi 0, %s98
      %s116 = sphi 0, %s116
      %s118 = sphi 0, %s116
      %s119 = sphi 0, %s118
      %s133 = sphi 0, %s119
      %s137 = sphi 0, %s137
      %s139 = sphi 0, %s137
      %s140 = sphi 0, %s139
      %s154 = sphi 0, %s140
      %s158 = sphi 0, %s158
      %s160 = sphi 0, %s158
      %s161 = sphi 0, %s160
      %s175 = sphi 0, %s161
      %s179 = sphi 0, %s179
      %s181 = sphi 0, %s179
      %s182 = sphi 0, %s181
      %s196 = sphi 0, %s182
      %s200 = sphi 0, %s200
      %s202 = sphi 0, %s200
      %s203 = sphi 0, %s202
      %s217 = sphi 0, %s203
      %s223 = sphi 0, %s225
      %s226 = sphi 0, %s223
      %s227 = sphi 0, %s226
      %s243 = sphi 0, %s227
    $region4: #{tpu_custom_call.1} parent=1 // loop_header_branch
      %22 = sbr.rel (%p20) target = $region8
    $region5: #{tpu_custom_call.1} parent=1 // loop_body
      %s24 = ssub.s32 %s19, 1
      %s25 = ssub.s32 %s19, 2
      %s26 = sadd.s32 %s19, 1
      %s27 = ssub.s32 %s19, %s26
      %p28 = scmp.eq.s32.totalorder %s27, 0
      %s30 = sadd.s32 %s29, 1
      %s31 = scalar_select %p28, %s29, %s30
      %p34 = pneg %p28
      %p35 = scmp.eq.s32.totalorder %s19, 1
      %p36 = por %p34, %p35
      %p37 = scmp.ne.s32.totalorder %s29, %s32
      %p38 = scmp.eq.s32.totalorder %s19, 0
      %p39 = por %p37, %p38
      %p40 = scmp.ne.s32.totalorder %s29, %s32
      %p41 = scmp.eq.s32.totalorder %s24, 1
      %p42 = por %p40, %p41
      %p43 = scmp.ne.s32.totalorder %s32, %s33
      %p44 = scmp.eq.s32.totalorder %s24, 0
      %p45 = por %p43, %p44
      %p46 = scmp.ne.s32.totalorder %s32, %s33
      %p47 = scmp.eq.s32.totalorder %s25, 1
      %p48 = por %p46, %p47
      %p50 = scmp.ne.s32.totalorder %s33, %s49
      %p51 = scmp.eq.s32.totalorder %s25, 0
      %p52 = por %p50, %p51
      %s54 = sadd.s32 %s53, 1
      %p57 = scmp.eq.s32.totalorder %s19, 1
      %p58 = scmp.ne.s32.totalorder %s53, %s55
      %p59 = scmp.eq.s32.totalorder %s19, 0
      %p60 = por %p58, %p59
      %p61 = scmp.ne.s32.totalorder %s53, %s55
      %p62 = scmp.eq.s32.totalorder %s24, 1
      %p63 = por %p61, %p62
      %p64 = scmp.ne.s32.totalorder %s55, %s56
      %p65 = scmp.eq.s32.totalorder %s24, 0
      %p66 = por %p64, %p65
      %p67 = scmp.ne.s32.totalorder %s55, %s56
      %p68 = scmp.eq.s32.totalorder %s25, 1
      %p69 = por %p67, %p68
      %p71 = scmp.ne.s32.totalorder %s56, %s70
      %p72 = scmp.eq.s32.totalorder %s25, 0
      %p73 = por %p71, %p72
      %s75 = sadd.s32 %s74, 1
      %p78 = scmp.eq.s32.totalorder %s19, 1
      %p79 = scmp.ne.s32.totalorder %s74, %s76
      %p80 = scmp.eq.s32.totalorder %s19, 0
      %p81 = por %p79, %p80
      %p82 = scmp.ne.s32.totalorder %s74, %s76
      %p83 = scmp.eq.s32.totalorder %s24, 1
      %p84 = por %p82, %p83
      %p85 = scmp.ne.s32.totalorder %s76, %s77
      %p86 = scmp.eq.s32.totalorder %s24, 0
      %p87 = por %p85, %p86
      %p88 = scmp.ne.s32.totalorder %s76, %s77
      %p89 = scmp.eq.s32.totalorder %s25, 1
      %p90 = por %p88, %p89
      %p92 = scmp.ne.s32.totalorder %s77, %s91
      %p93 = scmp.eq.s32.totalorder %s25, 0
      %p94 = por %p92, %p93
      %s96 = sadd.s32 %s95, 1
      %p99 = scmp.eq.s32.totalorder %s19, 1
      %p100 = scmp.ne.s32.totalorder %s95, %s97
      %p101 = scmp.eq.s32.totalorder %s19, 0
      %p102 = por %p100, %p101
      %p103 = scmp.ne.s32.totalorder %s95, %s97
      %p104 = scmp.eq.s32.totalorder %s24, 1
      %p105 = por %p103, %p104
      %p106 = scmp.ne.s32.totalorder %s97, %s98
      %p107 = scmp.eq.s32.totalorder %s24, 0
      %p108 = por %p106, %p107
      %p109 = scmp.ne.s32.totalorder %s97, %s98
      %p110 = scmp.eq.s32.totalorder %s25, 1
      %p111 = por %p109, %p110
      %p113 = scmp.ne.s32.totalorder %s98, %s112
      %p114 = scmp.eq.s32.totalorder %s25, 0
      %p115 = por %p113, %p114
      %s117 = sadd.s32 %s116, 1
      %p120 = scmp.eq.s32.totalorder %s19, 1
      %p121 = scmp.ne.s32.totalorder %s116, %s118
      %p122 = scmp.eq.s32.totalorder %s19, 0
      %p123 = por %p121, %p122
      %p124 = scmp.ne.s32.totalorder %s116, %s118
      %p125 = scmp.eq.s32.totalorder %s24, 1
      %p126 = por %p124, %p125
      %p127 = scmp.ne.s32.totalorder %s118, %s119
      %p128 = scmp.eq.s32.totalorder %s24, 0
      %p129 = por %p127, %p128
      %p130 = scmp.ne.s32.totalorder %s118, %s119
      %p131 = scmp.eq.s32.totalorder %s25, 1
      %p132 = por %p130, %p131
      %p134 = scmp.ne.s32.totalorder %s119, %s133
      %p135 = scmp.eq.s32.totalorder %s25, 0
      %p136 = por %p134, %p135
      %s138 = sadd.s32 %s137, 1
      %p141 = scmp.eq.s32.totalorder %s19, 1
      %p142 = scmp.ne.s32.totalorder %s137, %s139
      %p143 = scmp.eq.s32.totalorder %s19, 0
      %p144 = por %p142, %p143
      %p145 = scmp.ne.s32.totalorder %s137, %s139
      %p146 = scmp.eq.s32.totalorder %s24, 1
      %p147 = por %p145, %p146
      %p148 = scmp.ne.s32.totalorder %s139, %s140
      %p149 = scmp.eq.s32.totalorder %s24, 0
      %p150 = por %p148, %p149
      %p151 = scmp.ne.s32.totalorder %s139, %s140
      %p152 = scmp.eq.s32.totalorder %s25, 1
      %p153 = por %p151, %p152
      %p155 = scmp.ne.s32.totalorder %s140, %s154
      %p156 = scmp.eq.s32.totalorder %s25, 0
      %p157 = por %p155, %p156
      %s159 = sadd.s32 %s158, 1
      %p162 = scmp.eq.s32.totalorder %s19, 1
      %p163 = scmp.ne.s32.totalorder %s158, %s160
      %p164 = scmp.eq.s32.totalorder %s19, 0
      %p165 = por %p163, %p164
      %p166 = scmp.ne.s32.totalorder %s158, %s160
      %p167 = scmp.eq.s32.totalorder %s24, 1
      %p168 = por %p166, %p167
      %p169 = scmp.ne.s32.totalorder %s160, %s161
      %p170 = scmp.eq.s32.totalorder %s24, 0
      %p171 = por %p169, %p170
      %p172 = scmp.ne.s32.totalorder %s160, %s161
      %p173 = scmp.eq.s32.totalorder %s25, 1
      %p174 = por %p172, %p173
      %p176 = scmp.ne.s32.totalorder %s161, %s175
      %p177 = scmp.eq.s32.totalorder %s25, 0
      %p178 = por %p176, %p177
      %s180 = sadd.s32 %s179, 1
      %p183 = scmp.eq.s32.totalorder %s19, 1
      %p184 = scmp.ne.s32.totalorder %s179, %s181
      %p185 = scmp.eq.s32.totalorder %s19, 0
      %p186 = por %p184, %p185
      %p187 = scmp.ne.s32.totalorder %s179, %s181
      %p188 = scmp.eq.s32.totalorder %s24, 1
      %p189 = por %p187, %p188
      %p190 = scmp.ne.s32.totalorder %s181, %s182
      %p191 = scmp.eq.s32.totalorder %s24, 0
      %p192 = por %p190, %p191
      %p193 = scmp.ne.s32.totalorder %s181, %s182
      %p194 = scmp.eq.s32.totalorder %s25, 1
      %p195 = por %p193, %p194
      %p197 = scmp.ne.s32.totalorder %s182, %s196
      %p198 = scmp.eq.s32.totalorder %s25, 0
      %p199 = por %p197, %p198
      %s201 = sadd.s32 %s200, 1
      %p204 = scmp.eq.s32.totalorder %s19, 1
      %p205 = scmp.ne.s32.totalorder %s200, %s202
      %p206 = scmp.eq.s32.totalorder %s19, 0
      %p207 = por %p205, %p206
      %p208 = scmp.ne.s32.totalorder %s200, %s202
      %p209 = scmp.eq.s32.totalorder %s24, 1
      %p210 = por %p208, %p209
      %p211 = scmp.ne.s32.totalorder %s202, %s203
      %p212 = scmp.eq.s32.totalorder %s24, 0
      %p213 = por %p211, %p212
      %p214 = scmp.ne.s32.totalorder %s202, %s203
      %p215 = scmp.eq.s32.totalorder %s25, 1
      %p216 = por %p214, %p215
      %p218 = scmp.ne.s32.totalorder %s203, %s217
      %p219 = scmp.eq.s32.totalorder %s25, 0
      %p220 = por %p218, %p219
      %s221 = ssub.s32 %s19, %s26
      %p222 = scmp.eq.s32.totalorder %s221, 0
      %s224 = sadd.s32 %s223, 1
      %s225 = scalar_select %p222, %s223, %s224
      %p228 = pneg %p222
      %p229 = scmp.eq.s32.totalorder %s19, 1
      %p230 = por %p228, %p229
      %p231 = scmp.ne.s32.totalorder %s223, %s226
      %p232 = scmp.eq.s32.totalorder %s19, 0
      %p233 = por %p231, %p232
      %p234 = scmp.ne.s32.totalorder %s223, %s226
      %p235 = scmp.eq.s32.totalorder %s24, 1
      %p236 = por %p234, %p235
      %p237 = scmp.ne.s32.totalorder %s226, %s227
      %p238 = scmp.eq.s32.totalorder %s24, 0
      %p239 = por %p237, %p238
      %p240 = scmp.ne.s32.totalorder %s226, %s227
      %p241 = scmp.eq.s32.totalorder %s25, 1
      %p242 = por %p240, %p241
      %p244 = scmp.ne.s32.totalorder %s227, %s243
      %p245 = scmp.eq.s32.totalorder %s25, 0
      %p246 = por %p244, %p245
      %p247 = scmp.le.s32.totalorder 1, %s19
      %p248 = scmp.lt.s32.totalorder %s19, 3
      %p249 = pnand %p247, %p248
      %p250 = pneg %p249
      // Predicated region
      $region9: #{tpu_custom_call.1} parent=5 // pred_check
        _
      $region10: #{tpu_custom_call.1} parent=5 // pred_check_branch
        %252 = sbr.rel (%p249) target = $region12
      $region11: #{tpu_custom_call.1} parent=5 // pred_region
        %s253 = ssub.s32 %s19, 1
        // Predicated region
        $region13: #{tpu_custom_call.1} parent=11 // pred_check
          %p254 = pneg %p66
        $region14: #{tpu_custom_call.1} parent=11 // pred_check_branch
          %256 = sbr.rel (%p254) target = $region16
        $region15: #{tpu_custom_call.1} parent=11 // pred_region
          _
        $region16: #{tpu_custom_call.1} parent=11 // pred_fallthru
          _
        // Predicated region
        $region17: #{tpu_custom_call.1} parent=11 // pred_check
          %p257 = pneg %p87
        $region18: #{tpu_custom_call.1} parent=11 // pred_check_branch
          %259 = sbr.rel (%p257) target = $region20
        $region19: #{tpu_custom_call.1} parent=11 // pred_region
          _
        $region20: #{tpu_custom_call.1} parent=11 // pred_fallthru
          _
        // Predicated region
        $region21: #{tpu_custom_call.1} parent=11 // pred_check
          %p260 = pneg %p108
        $region22: #{tpu_custom_call.1} parent=11 // pred_check_branch
          %262 = sbr.rel (%p260) target = $region24
        $region23: #{tpu_custom_call.1} parent=11 // pred_region
          %s264 = ssub.s32 32, 32
          %265 = vsyncadd [#allocation3], %s264
          %s267 = sshll.u32 [#allocation2], 4
          %s268 = int_to_ptr.vmem [resolvable:$true] %s267
          %270 = dma.hbm_to_vmem [thread:$0]  %s3, 32, %s268, [#allocation3]
        $region24: #{tpu_custom_call.1} parent=11 // pred_fallthru
          _
        // Predicated region
        $region25: #{tpu_custom_call.1} parent=11 // pred_check
          %p271 = pneg %p129
        $region26: #{tpu_custom_call.1} parent=11 // pred_check_branch
          %273 = sbr.rel (%p271) target = $region28
        $region27: #{tpu_custom_call.1} parent=11 // pred_region
          _
        $region28: #{tpu_custom_call.1} parent=11 // pred_fallthru
          _
        // Predicated region
        $region29: #{tpu_custom_call.1} parent=11 // pred_check
          %p274 = pneg %p150
        $region30: #{tpu_custom_call.1} parent=11 // pred_check_branch
          %276 = sbr.rel (%p274) target = $region32
        $region31: #{tpu_custom_call.1} parent=11 // pred_region
          _
        $region32: #{tpu_custom_call.1} parent=11 // pred_fallthru
          _
        // Predicated region
        $region33: #{tpu_custom_call.1} parent=11 // pred_check
          %p277 = pneg %p171
        $region34: #{tpu_custom_call.1} parent=11 // pred_check_branch
          %279 = sbr.rel (%p277) target = $region36
        $region35: #{tpu_custom_call.1} parent=11 // pred_region
          _
        $region36: #{tpu_custom_call.1} parent=11 // pred_fallthru
          _
        // Predicated region
        $region37: #{tpu_custom_call.1} parent=11 // pred_check
          %p280 = pneg %p192
        $region38: #{tpu_custom_call.1} parent=11 // pred_check_branch
          %282 = sbr.rel (%p280) target = $region40
        $region39: #{tpu_custom_call.1} parent=11 // pred_region
          _
        $region40: #{tpu_custom_call.1} parent=11 // pred_fallthru
          _
        // Predicated region
        $region41: #{tpu_custom_call.1} parent=11 // pred_check
          %p283 = pneg %p213
        $region42: #{tpu_custom_call.1} parent=11 // pred_check_branch
          %285 = sbr.rel (%p283) target = $region44
        $region43: #{tpu_custom_call.1} parent=11 // pred_region
          _
        $region44: #{tpu_custom_call.1} parent=11 // pred_fallthru
          _
      $region12: #{tpu_custom_call.1} parent=5 // pred_fallthru
        _
      %p286 = scmp.lt.s32.totalorder %s19, 2
      // Predicated region
      $region45: #{tpu_custom_call.1} parent=5 // pred_check
        %p287 = pneg %p286
      $region46: #{tpu_custom_call.1} parent=5 // pred_check_branch
        %289 = sbr.rel (%p287) target = $region48
      $region47: #{tpu_custom_call.1} parent=5 // pred_region
        // Predicated region
        $region49: #{tpu_custom_call.1} parent=47 // pred_check
          %p290 = pneg %p39
        $region50: #{tpu_custom_call.1} parent=47 // pred_check_branch
          %292 = sbr.rel (%p290) target = $region52
        $region51: #{tpu_custom_call.1} parent=47 // pred_region
          %p293 = scmp.lt.s32.totalorder %s19, 1
          %s294 = scalar_select %p293, %s19, 1
          %s295 = smul.addr %s294, 2
          %s296 = smul.addr %s295, 4
          %s297 = scalar_lea.vmem %s0, %s296
        $region52: #{tpu_custom_call.1} parent=47 // pred_fallthru
          _
      $region48: #{tpu_custom_call.1} parent=5 // pred_fallthru
        _
      %p298 = scmp.le.s32.totalorder 1, %s19
      %p299 = scmp.lt.s32.totalorder %s19, 3
      %p300 = pnand %p298, %p299
      %p301 = pneg %p300
      // Predicated region
      $region53: #{tpu_custom_call.1} parent=5 // pred_check
        _
      $region54: #{tpu_custom_call.1} parent=5 // pred_check_branch
        %303 = sbr.rel (%p300) target = $region56
      $region55: #{tpu_custom_call.1} parent=5 // pred_region
        %s304 = ssub.s32 %s19, 1
        // Predicated region
        $region57: #{tpu_custom_call.1} parent=55 // pred_check
          %p305 = pneg %p108
        $region58: #{tpu_custom_call.1} parent=55 // pred_check_branch
          %307 = sbr.rel (%p305) target = $region60
        $region59: #{tpu_custom_call.1} parent=55 // pred_region
          %308 = dma.done [#allocation3], 32
        $region60: #{tpu_custom_call.1} parent=55 // pred_fallthru
          _
        %p309 = scmp.lt.s32.totalorder %s24, 1
        %s310 = scalar_select %p309, %s24, 1
        %s311 = smul.addr %s310, 2
        %s312 = smul.addr %s311, 4
        %s313 = scalar_lea.vmem %s0, %s312
        %p314 = pneg %p45
        %p315 = pneg %p42
        %p316 = pneg %p66
        %p317 = pneg %p63
        %p318 = pneg %p87
        %p319 = pneg %p84
        %p320 = pneg %p108
        %p321 = pneg %p105
        %p322 = pneg %p129
        %p323 = pneg %p126
        %p324 = pneg %p150
        %p325 = pneg %p147
        %p326 = pneg %p171
        %p327 = pneg %p168
        %p328 = pneg %p192
        %p329 = pneg %p189
        %p330 = pneg %p213
        %p331 = pneg %p210
        %p332 = pneg %p239
        %p333 = pneg %p236
        %s334 = sand.u32 %s226, 1
        %s335 = scalar_lea.sflag [#allocation4], %s334
        %s336 = sand.u32 %s226, 1
        %s337 = smul.addr %s336, 2
        %s338 = scalar_lea.vmem [#allocation5], %s337
        %p339 = scmp.lt.s32.totalorder %s24, 1
        %s340 = scalar_select %p339, %s24, 1
        %s341 = smul.addr %s340, 2
        %s342 = smul.addr %s341, 4
        %s343 = scalar_lea.vmem %s0, %s342
        %v345 = vld [vmem:[%s343] sm:$0xf]
        %v346 = vld [vmem:[%s343 + $0x4] sm:$0xf]
        %v347 = vld [vmem:[%s1] sm:$0x3]
        %v348 = vld [vmem:[%s2] sm:$0xf]
        %350 = vset.pattern.permute.xlu0 0
        %351 = vperm.xlu0 %350, %v348
        %v352 = vpop.permute.xlu0 %351
        %v356 = vunpack.c.l.b16 %v345
        %v357 = vunpack.c.l.b16 %v346
        %v358 = vpack.c.b16 %v357, %v356
        %vm360 = vcmask 130048
        %v362 = vsel %vm360, %v347, 0
        %364 = vmatprep.subr.bf16.mxu0 0
        %365 = vmatpush1.bf16.msra.mxu0 %v358
        %366 = vmatprep.subr.bf16.mxu0 0
        %367 = vmatpush1.bf16.msra.mxu0 0
        %368 = vmatprep.subr.bf16.mxu0 0
        %369 = vmatpush1.bf16.msra.mxu0 0
        %370 = vmatprep.subr.bf16.mxu0 0
        %371 = vmatpush1.bf16.msra.mxu0 0
        %372 = vmatprep.subr.bf16.mxu0 0
        %373 = vmatpush1.bf16.msra.mxu0 0
        %374 = vmatprep.subr.bf16.mxu0 0
        %375 = vmatpush1.bf16.msra.mxu0 0
        %376 = vmatprep.subr.bf16.mxu0 0
        %377 = vmatpush1.bf16.msra.mxu0 0
        %378 = vmatprep.subr.bf16.mxu0 0
        %379 = vmatpush1.bf16.msra.mxu0 0
        %380 = vmatprep.subr.bf16.mxu0 0
        %381 = vmatpush1.bf16.msra.mxu0 0
        %382 = vmatprep.subr.bf16.mxu0 0
        %383 = vmatpush1.bf16.msra.mxu0 0
        %384 = vmatprep.subr.bf16.mxu0 0
        %385 = vmatpush1.bf16.msra.mxu0 0
        %386 = vmatprep.subr.bf16.mxu0 0
        %387 = vmatpush1.bf16.msra.mxu0 0
        %388 = vmatprep.subr.bf16.mxu0 0
        %389 = vmatpush1.bf16.msra.mxu0 0
        %390 = vmatprep.subr.bf16.mxu0 0
        %391 = vmatpush1.bf16.msra.mxu0 0
        %392 = vmatprep.subr.bf16.mxu0 0
        %393 = vmatpush1.bf16.msra.mxu0 0
        %394 = vmatprep.subr.bf16.mxu0 0
        %395 = vmatpush1.bf16.msra.mxu0 0
        %396 = vmatprep.mubr.bf16.mxu0 0
        %397 = vmatmul.mubr.bf16.gmra.mrb[0].mxu0 %v362
        %v398 = vpop.f32.mrb[0].mxu0
        %v399 = vadd.f32 %v352, %v398
        %v400 = vpop.f32.mrb[0].mxu0
        %v401 = vpop.f32.mrb[0].mxu0
        %v402 = vpop.f32.mrb[0].mxu0
        %403 = vdwg.mxu0
        %v404 = vmul.f32 %v399, 0.5
        %v405 = vmul.f32 %v399, 0.70710677
        %v406 = verf.f32.pop %v405
        %v407 = vadd.f32 %v406, 1.0
        %v408 = vmul.f32 %v404, %v407
        %v409 = vld [vmem:[#allocation2] sm:$0x3]
        %v410 = vpack.c.bf16 %v408, %v408
        %v411 = vld [vmem:[%s4] sm:$0xf]
        %413 = vset.pattern.permute.xlu0 0
        %414 = vperm.xlu0 %413, %v411
        %v415 = vpop.permute.xlu0 %414
        %vm417 = vcmask 31744
        %v419 = vsel %vm417, %v409, 0
        %vm421 = vcmask 1041408
        %v423 = vsel %vm421, %v410, 0
        %425 = vmatprep.subr.bf16.mxu0 0
        %426 = vmatpush1.bf16.msra.mxu0 %v423
        %427 = vmatprep.subr.bf16.mxu0 0
        %428 = vmatpush1.bf16.msra.mxu0 0
        %429 = vmatprep.subr.bf16.mxu0 0
        %430 = vmatpush1.bf16.msra.mxu0 0
        %431 = vmatprep.subr.bf16.mxu0 0
        %432 = vmatpush1.bf16.msra.mxu0 0
        %433 = vmatprep.subr.bf16.mxu0 0
        %434 = vmatpush1.bf16.msra.mxu0 0
        %435 = vmatprep.subr.bf16.mxu0 0
        %436 = vmatpush1.bf16.msra.mxu0 0
        %437 = vmatprep.subr.bf16.mxu0 0
        %438 = vmatpush1.bf16.msra.mxu0 0
        %439 = vmatprep.subr.bf16.mxu0 0
        %440 = vmatpush1.bf16.msra.mxu0 0
        %441 = vmatprep.subr.bf16.mxu0 0
        %442 = vmatpush1.bf16.msra.mxu0 0
        %443 = vmatprep.subr.bf16.mxu0 0
        %444 = vmatpush1.bf16.msra.mxu0 0
        %445 = vmatprep.subr.bf16.mxu0 0
        %446 = vmatpush1.bf16.msra.mxu0 0
        %447 = vmatprep.subr.bf16.mxu0 0
        %448 = vmatpush1.bf16.msra.mxu0 0
        %449 = vmatprep.subr.bf16.mxu0 0
        %450 = vmatpush1.bf16.msra.mxu0 0
        %451 = vmatprep.subr.bf16.mxu0 0
        %452 = vmatpush1.bf16.msra.mxu0 0
        %453 = vmatprep.subr.bf16.mxu0 0
        %454 = vmatpush1.bf16.msra.mxu0 0
        %455 = vmatprep.subr.bf16.mxu0 0
        %456 = vmatpush1.bf16.msra.mxu0 0
        %457 = vmatprep.mubr.bf16.mxu0 0
        %458 = vmatmul.mubr.bf16.gmra.mrb[0].mxu0 %v419
        %v459 = vpop.f32.mrb[0].mxu0
        %v460 = vadd.f32 %v415, %v459
        %v461 = vpop.f32.mrb[0].mxu0
        %v462 = vpop.f32.mrb[0].mxu0
        %v463 = vpop.f32.mrb[0].mxu0
        %464 = vdwg.mxu0
        %vm465 = vcmask 257024
        %v466 = vsel %vm465, %v460, 0.0
        %v467 = vrot.slane %v466, 4
        %v468 = vadd.f32 %v466, %v467
        %v469 = vrot.slane %v468, 2
        %v470 = vadd.f32 %v468, %v469
        %v471 = vrot.slane %v470, 1
        %v472 = vadd.f32 %v470, %v471
        %v473 = vrcp.pop 4.0
        %v474 = vmul.f32 %v472, %v473
        %v475 = vsub.f32 %v460, %v474
        %v476 = vmul.f32 %v475, %v475
        %v477 = vsel %vm465, %v476, 0.0
        %v478 = vrot.slane %v477, 4
        %v479 = vadd.f32 %v477, %v478
        %v480 = vrot.slane %v479, 2
        %v481 = vadd.f32 %v479, %v480
        %v482 = vrot.slane %v481, 1
        %v483 = vadd.f32 %v481, %v482
        %v484 = vmul.f32 %v483, %v473
        %v485 = vadd.f32 %v484, 1e-06
        %v486 = vrsqrt.pop %v485
        %v487 = vmul.f32 %v475, %v486
        %v488 = vld [vmem:[%s5] sm:$0xf]
        %490 = vset.pattern.permute.xlu0 0
        %491 = vperm.xlu0 %490, %v488
        %v492 = vpop.permute.xlu0 %491
        %v494 = vmul.f32 %v487, %v492
        %v495 = vld [vmem:[%s6] sm:$0xf]
        %497 = vset.pattern.permute.xlu0 0
        %498 = vperm.xlu0 %497, %v495
        %v499 = vpop.permute.xlu0 %498
        %v501 = vadd.f32 %v494, %v499
        %v502 = vpack.c.bf16 %v501, %v501
        %v503 = vld [vmem:[%s7] sm:$0xf]
        %v504 = vld [vmem:[%s7 + $0x4] sm:$0xf]
        %v505 = vld [vmem:[%s7 + $0x8] sm:$0xf]
        %v506 = vld [vmem:[%s7 + $0xc] sm:$0xf]
        %v507 = vld [vmem:[%s8] sm:$0x1]
        %v509 = vlaneseq
        %v510 = vshrl.u32 %v509, 7
        %v511 = vsub.s32 0, %v510
        %v512 = vrot.slane %v507, %v511
        %v518 = vunpack.c.l.b16 %v503
        %v519 = vunpack.c.l.b16 %v504
        %v520 = vunpack.c.l.b16 %v505
        %v521 = vunpack.c.l.b16 %v506
        %v522 = vpack.c.b16 %v519, %v518
        %v523 = vpack.c.b16 %v521, %v520
        %vm526 = vcmask 261120
        %v528 = vsel %vm526, %v502, 0
        %530 = vmatprep.subr.bf16.mxu0 0
        %531 = vmatpush1.bf16.msra.mxu0 %v522
        %532 = vmatprep.subr.bf16.mxu0 0
        %533 = vmatpush1.bf16.msra.mxu0 %v523
        %534 = vmatprep.subr.bf16.mxu0 0
        %535 = vmatpush1.bf16.msra.mxu0 0
        %536 = vmatprep.subr.bf16.mxu0 0
        %537 = vmatpush1.bf16.msra.mxu0 0
        %538 = vmatprep.subr.bf16.mxu0 0
        %539 = vmatpush1.bf16.msra.mxu0 0
        %540 = vmatprep.subr.bf16.mxu0 0
        %541 = vmatpush1.bf16.msra.mxu0 0
        %542 = vmatprep.subr.bf16.mxu0 0
        %543 = vmatpush1.bf16.msra.mxu0 0
        %544 = vmatprep.subr.bf16.mxu0 0
        %545 = vmatpush1.bf16.msra.mxu0 0
        %546 = vmatprep.subr.bf16.mxu0 0
        %547 = vmatpush1.bf16.msra.mxu0 0
        %548 = vmatprep.subr.bf16.mxu0 0
        %549 = vmatpush1.bf16.msra.mxu0 0
        %550 = vmatprep.subr.bf16.mxu0 0
        %551 = vmatpush1.bf16.msra.mxu0 0
        %552 = vmatprep.subr.bf16.mxu0 0
        %553 = vmatpush1.bf16.msra.mxu0 0
        %554 = vmatprep.subr.bf16.mxu0 0
        %555 = vmatpush1.bf16.msra.mxu0 0
        %556 = vmatprep.subr.bf16.mxu0 0
        %557 = vmatpush1.bf16.msra.mxu0 0
        %558 = vmatprep.subr.bf16.mxu0 0
        %559 = vmatpush1.bf16.msra.mxu0 0
        %560 = vmatprep.subr.bf16.mxu0 0
        %561 = vmatpush1.bf16.msra.mxu0 0
        %562 = vmatprep.mubr.bf16.mxu0 0
        %563 = vmatmul.mubr.bf16.gmra.mrb[0].mxu0 %v528
        %v564 = vpop.f32.mrb[0].mxu0
        %v565 = vadd.f32 %v512, %v564
        %v566 = vpop.f32.mrb[0].mxu0
        %v567 = vpop.f32.mrb[0].mxu0
        %v568 = vpop.f32.mrb[0].mxu0
        %569 = vdwg.mxu0
        %v570 = vmul.f32 %v565, 0.5
        %v571 = vpack.c.bf16 %v570, %v570
        %vm572 = vcmask 254976
        %573 = vst.msk [vmem:[%s338] sm:$0x3] %vm572, %v571
        %s574 = sand.u32 %s226, 1
        %s575 = scalar_lea.sflag [#allocation4], %s574
        %s576 = sand.u32 %s226, 1
        %s577 = smul.addr %s576, 2
        %s578 = scalar_lea.vmem [#allocation5], %s577
        // Predicated region
        $region61: #{tpu_custom_call.1} parent=55 // pred_check
          %p579 = pneg %p236
        $region62: #{tpu_custom_call.1} parent=55 // pred_check_branch
          %581 = sbr.rel (%p579) target = $region64
        $region63: #{tpu_custom_call.1} parent=55 // pred_region
          %s583 = ssub.s32 32, 32
          %584 = vsyncadd %s575, %s583
          %s585 = smul.addr %s24, 32
          %s586 = scalar_lea.hbm %s9, %s585
          %s588 = sshll.u32 %s578, 4
          %s589 = int_to_ptr.vmem [resolvable:$true] %s588
          %591 = dma.vmem_to_hbm [thread:$0]  %s589, 32, %s586, %s575
        $region64: #{tpu_custom_call.1} parent=55 // pred_fallthru
          _
      $region56: #{tpu_custom_call.1} parent=5 // pred_fallthru
        _
      %p592 = scmp.le.s32.totalorder 2, %s19
      // Predicated region
      $region65: #{tpu_custom_call.1} parent=5 // pred_check
        %p593 = pneg %p592
      $region66: #{tpu_custom_call.1} parent=5 // pred_check_branch
        %595 = sbr.rel (%p593) target = $region68
      $region67: #{tpu_custom_call.1} parent=5 // pred_region
        %s596 = ssub.s32 %s19, 2
        // Predicated region
        $region69: #{tpu_custom_call.1} parent=67 // pred_check
          %p597 = pneg %p242
        $region70: #{tpu_custom_call.1} parent=67 // pred_check_branch
          %599 = sbr.rel (%p597) target = $region72
        $region71: #{tpu_custom_call.1} parent=67 // pred_region
          %s600 = sand.u32 %s227, 1
          %s601 = scalar_lea.sflag [#allocation4], %s600
          %s602 = sand.u32 %s227, 1
          %s603 = smul.addr %s602, 2
          %s604 = scalar_lea.vmem [#allocation5], %s603
          %605 = dma.done %s601, 32
        $region72: #{tpu_custom_call.1} parent=67 // pred_fallthru
          _
      $region68: #{tpu_custom_call.1} parent=5 // pred_fallthru
        _
    $region6: #{tpu_custom_call.1} parent=1 // loop_footer
      %s23 = sadd.s32 1, %s19
    $region7: #{tpu_custom_call.1} parent=1 // loop_footer_branch
      %18 = sbr.rel target = $region3
    $region8: #{tpu_custom_call.1} parent=1 // loop_exit
      _
    %606 = vsyncpa [#allocation3], 1
    %s607 = scalar_lea.sflag [#allocation3], 1
    %608 = vsyncpa %s607, 1
    %609 = vsyncpa [#allocation4], 1
    %s610 = scalar_lea.sflag [#allocation4], 1
    %611 = vsyncpa %s610, 1

</llo_original>
